<compile_context>
chip_gen: v7x
topology: tpu7x:2x2x1
jax: 0.10.0
libtpu: 0.0.40
codegen_flags: <defaults>
</compile_context>

<pallas_src>
import functools

import jax
import jax.numpy as jnp
from jax import lax
from jax.experimental import pallas as pl
from jax.experimental.pallas import tpu as pltpu


def _ffn_kernel(x_ref, gamma_ref, beta_ref, w1_ref, b1_ref, w2_ref, b2_ref,
                o_ref, xn_ref, acc_ref, *, eps):
    # grid = (rows // TM, H // TH); axis 1 is the reduction over hidden-dim tiles.
    # x_ref: (TM, D)  gamma/beta/b2: (1, D)  w1: (D, TH)  b1: (1, TH)  w2: (TH, D)
    k = pl.program_id(1)

    @pl.when(k == 0)
    def _():
        # --- pre-norm LayerNorm over last dim (biased variance, torch eps) ---
        # Computed once per row tile, cached in VMEM scratch in the matmul dtype.
        x = x_ref[...].astype(jnp.float32)
        mean = jnp.mean(x, axis=-1, keepdims=True)
        centered = x - mean
        var = jnp.mean(centered * centered, axis=-1, keepdims=True)
        xn = centered * lax.rsqrt(var + eps)
        xn = xn * gamma_ref[...].astype(jnp.float32) + beta_ref[...].astype(jnp.float32)
        xn_ref[...] = xn.astype(xn_ref.dtype)
        acc_ref[...] = jnp.zeros_like(acc_ref)

    # --- ffn_layer1 slab: Linear(D -> TH) + ReLU (f32 accumulation on MXU) ---
    h = jnp.dot(xn_ref[...], w1_ref[...], preferred_element_type=jnp.float32)
    h = jnp.maximum(h + b1_ref[...].astype(jnp.float32), 0.0)

    # --- ffn_layer2 partial: Linear(TH -> D) contribution, accumulated over TH ---
    acc_ref[...] += jnp.dot(h.astype(w2_ref.dtype), w2_ref[...],
                            preferred_element_type=jnp.float32)

    @pl.when(k == pl.num_programs(1) - 1)
    def _():
        y = acc_ref[...] + b2_ref[...].astype(jnp.float32)
        # --- residual add (residual_dropout with p=0 is identity) ---
        o_ref[...] = (x_ref[...].astype(jnp.float32) + y).astype(o_ref.dtype)


def _round_up(a, m):
    return ((a + m - 1) // m) * m


def transformer_feed_forward(x, gamma, beta, w1, b1, w2, b2,
                             *, eps=1e-5, row_tile=256, hidden_tile=None):
    """x: (rows, D). w1: (D, H), w2: (H, D), biases/scales shaped (1, .)."""
    rows, D = x.shape
    Dw, H = w1.shape
    assert Dw == D and w2.shape == (H, D)
    assert gamma.shape == (1, D) and beta.shape == (1, D)
    assert b1.shape == (1, H) and b2.shape == (1, D)

    if hidden_tile is None:
        # Single slab for moderate H; tile H for large hidden dims (VMEM budget).
        hidden_tile = H if H <= 1024 else 512
    assert H % hidden_tile == 0, "hidden_tile must divide H"
    assert hidden_tile == H or hidden_tile % 128 == 0, \
        "hidden_tile must be a multiple of 128 (or equal to H)"

    # Big row tiles feed the MXU and amortize per-grid-step overhead; clamp to the
    # (8-aligned) row count so small inputs don't pay for a huge padded tile.
    tm = min(row_tile, _round_up(rows, 8))
    rows_p = _round_up(rows, tm)
    if rows_p != rows:
        x_p = jnp.zeros((rows_p, D), x.dtype).at[:rows].set(x)
    else:
        x_p = x

    grid = (rows_p // tm, H // hidden_tile)

    # LayerNorm output is cached in the dtype the first matmul consumes.
    xn_dtype = w1.dtype

    # Explicit VMEM budget with headroom (double-buffered tiles + scratch).
    act_bytes = jnp.dtype(x.dtype).itemsize
    w_bytes = jnp.dtype(w1.dtype).itemsize
    xn_bytes = jnp.dtype(xn_dtype).itemsize
    est = (2 * tm * D * act_bytes                 # x tiles
           + 2 * tm * D * act_bytes               # out tiles
           + 2 * D * hidden_tile * w_bytes        # w1 slabs
           + 2 * hidden_tile * D * w_bytes        # w2 slabs
           + tm * D * xn_bytes                    # cached LayerNorm output
           + tm * D * 4                           # f32 accumulator
           + 2 * (3 * D + hidden_tile) * 4)       # gamma/beta/b1/b2
    vmem_limit = min(max(2 * est + (2 << 20), 32 << 20), 96 << 20)

    kernel = functools.partial(_ffn_kernel, eps=eps)

    out_p = pl.pallas_call(
        kernel,
        out_shape=jax.ShapeDtypeStruct((rows_p, D), x.dtype),
        grid_spec=pltpu.PrefetchScalarGridSpec(
            num_scalar_prefetch=0,
            grid=grid,
            in_specs=[
                pl.BlockSpec((tm, D), lambda i, k: (i, 0)),            # x tile
                pl.BlockSpec((1, D), lambda i, k: (0, 0)),             # gamma
                pl.BlockSpec((1, D), lambda i, k: (0, 0)),             # beta
                pl.BlockSpec((D, hidden_tile), lambda i, k: (0, k)),   # w1 slab
                pl.BlockSpec((1, hidden_tile), lambda i, k: (0, k)),   # b1 slab
                pl.BlockSpec((hidden_tile, D), lambda i, k: (k, 0)),   # w2 slab
                pl.BlockSpec((1, D), lambda i, k: (0, 0)),             # b2
            ],
            out_specs=pl.BlockSpec((tm, D), lambda i, k: (i, 0)),
            scratch_shapes=[
                pltpu.VMEM((tm, D), xn_dtype),      # cached LayerNorm output
                pltpu.VMEM((tm, D), jnp.float32),   # f32 accumulator
            ],
        ),
        compiler_params=pltpu.CompilerParams(
            dimension_semantics=("parallel", "arbitrary"),
            vmem_limit_bytes=int(vmem_limit)),
    )(x_p, gamma, beta, w1, b1, w2, b2)

    return out_p[:rows] if rows_p != rows else out_p


def reference(x, gamma, beta, w1, b1, w2, b2, eps=1e-5):
    mean = jnp.mean(x, axis=-1, keepdims=True)
    var = jnp.mean((x - mean) ** 2, axis=-1, keepdims=True)
    xn = (x - mean) * lax.rsqrt(var + eps) * gamma + beta
    h = jnp.maximum(xn @ w1 + b1, 0.0)
    y = h @ w2 + b2
    return x + y


if __name__ == "__main__":
    # Small but lane-dense shapes: batch=2, seq=8, input/output_dims=128, hidden=256.
    B, S, D, H = 2, 8, 128, 256
    key = jax.random.PRNGKey(0)
    kx, kg, kb, kw1, kb1, kw2, kb2 = jax.random.split(key, 7)

    x = jax.random.normal(kx, (B, S, D), dtype=jnp.float32)
    gamma = 1.0 + 0.1 * jax.random.normal(kg, (1, D), dtype=jnp.float32)
    beta = 0.1 * jax.random.normal(kb, (1, D), dtype=jnp.float32)
    w1 = jax.random.normal(kw1, (D, H), dtype=jnp.float32) / jnp.sqrt(D)
    b1 = 0.05 * jax.random.normal(kb1, (1, H), dtype=jnp.float32)
    w2 = jax.random.normal(kw2, (H, D), dtype=jnp.float32) / jnp.sqrt(H)
    b2 = 0.05 * jax.random.normal(kb2, (1, D), dtype=jnp.float32)

    x2d = x.reshape(B * S, D)  # [rows, features]
    ref = reference(x2d, gamma, beta, w1, b1, w2, b2).reshape(B, S, D)

    # Single hidden slab (H fits in one tile).
    out = transformer_feed_forward(x2d, gamma, beta, w1, b1, w2, b2)
    out = jax.block_until_ready(out).reshape(B, S, D)
    assert jnp.allclose(out, ref, atol=1e-4, rtol=1e-4), "mismatch (single H tile)"

    # Exercise the tiled hidden-dim reduction path (grid axis 1 > 1).
    out_t = transformer_feed_forward(x2d, gamma, beta, w1, b1, w2, b2,
                                     hidden_tile=128)
    out_t = jax.block_until_ready(out_t).reshape(B, S, D)
    assert jnp.allclose(out_t, ref, atol=1e-4, rtol=1e-4), "mismatch (tiled H)"

    print("KERNEL_OK")
</pallas_src>

<mosaic_0001>
module attributes {stable_mosaic.version = 11 : i64} {
  func.func @_ffn_kernel(%arg0: i32, %arg1: i32, %arg2: memref<16x128xf32, #tpu.memory_space<vmem>>, %arg3: memref<1x128xf32, #tpu.memory_space<vmem>>, %arg4: memref<1x128xf32, #tpu.memory_space<vmem>>, %arg5: memref<128x256xf32, #tpu.memory_space<vmem>>, %arg6: memref<1x256xf32, #tpu.memory_space<vmem>>, %arg7: memref<256x128xf32, #tpu.memory_space<vmem>>, %arg8: memref<1x128xf32, #tpu.memory_space<vmem>>, %arg9: memref<16x128xf32, #tpu.memory_space<vmem>>, %arg10: memref<16x128xf32, #tpu.memory_space<vmem>>, %arg11: memref<16x128xf32, #tpu.memory_space<vmem>>) attributes {dimension_semantics = [#tpu.dimension_semantics<parallel>, #tpu.dimension_semantics<arbitrary>], iteration_bounds = array<i64: 1, 1>, scalar_prefetch = 0 : i64, scratch_operands = 2 : i64, tpu.core_type = #tpu.core_type<tc>, window_params = [{transform_indices = @transform_0, window_bounds = array<i64: 16, 128>}, {pipeline_mode = #tpu.pipeline_mode<synchronous>, transform_indices = @transform_1, window_bounds = array<i64: 1, 128>}, {pipeline_mode = #tpu.pipeline_mode<synchronous>, transform_indices = @transform_2, window_bounds = array<i64: 1, 128>}, {transform_indices = @transform_3, window_bounds = array<i64: 128, 256>}, {transform_indices = @transform_4, window_bounds = array<i64: 1, 256>}, {transform_indices = @transform_5, window_bounds = array<i64: 256, 128>}, {pipeline_mode = #tpu.pipeline_mode<synchronous>, transform_indices = @transform_6, window_bounds = array<i64: 1, 128>}, {transform_indices = @transform_7, window_bounds = array<i64: 16, 128>}]} {
    %c0_i32 = arith.constant 0 : i32
    %0 = arith.cmpi eq, %arg1, %c0_i32 : i32
    %1 = arith.extui %0 : i1 to i32
    %c0_i32_0 = arith.constant 0 : i32
    %2 = arith.cmpi ne, %1, %c0_i32_0 : i32
    scf.if %2 {
      %c0_16 = arith.constant 0 : index
      %c0_17 = arith.constant 0 : index
      %19 = vector.load %arg2[%c0_16, %c0_17] : memref<16x128xf32, #tpu.memory_space<vmem>>, vector<16x128xf32>
      %cst_18 = arith.constant dense<0.000000e+00> : vector<16xf32>
      %20 = vector.multi_reduction <add>, %19, %cst_18 [1] : vector<16x128xf32> to vector<16xf32>
      %21 = vector.shape_cast %20 : vector<16xf32> to vector<16x1xf32>
      %cst_19 = arith.constant 1.280000e+02 : f32
      %22 = vector.broadcast %cst_19 : f32 to vector<16x1xf32>
      %23 = arith.divf %21, %22 : vector<16x1xf32>
      %24 = vector.broadcast %23 : vector<16x1xf32> to vector<16x128xf32>
      %25 = arith.subf %19, %24 : vector<16x128xf32>
      %26 = arith.mulf %25, %25 : vector<16x128xf32>
      %cst_20 = arith.constant dense<0.000000e+00> : vector<16xf32>
      %27 = vector.multi_reduction <add>, %26, %cst_20 [1] : vector<16x128xf32> to vector<16xf32>
      %28 = vector.shape_cast %27 : vector<16xf32> to vector<16x1xf32>
      %cst_21 = arith.constant 1.280000e+02 : f32
      %29 = vector.broadcast %cst_21 : f32 to vector<16x1xf32>
      %30 = arith.divf %28, %29 : vector<16x1xf32>
      %cst_22 = arith.constant 9.99999974E-6 : f32
      %31 = vector.broadcast %cst_22 : f32 to vector<16x1xf32>
      %32 = arith.addf %30, %31 : vector<16x1xf32>
      %33 = math.rsqrt %32 : vector<16x1xf32>
      %34 = vector.broadcast %33 : vector<16x1xf32> to vector<16x128xf32>
      %35 = arith.mulf %25, %34 : vector<16x128xf32>
      %c0_23 = arith.constant 0 : index
      %c0_24 = arith.constant 0 : index
      %36 = vector.load %arg3[%c0_23, %c0_24] : memref<1x128xf32, #tpu.memory_space<vmem>>, vector<1x128xf32>
      %37 = vector.broadcast %36 : vector<1x128xf32> to vector<16x128xf32>
      %38 = arith.mulf %35, %37 : vector<16x128xf32>
      %c0_25 = arith.constant 0 : index
      %c0_26 = arith.constant 0 : index
      %39 = vector.load %arg4[%c0_25, %c0_26] : memref<1x128xf32, #tpu.memory_space<vmem>>, vector<1x128xf32>
      %40 = vector.broadcast %39 : vector<1x128xf32> to vector<16x128xf32>
      %41 = arith.addf %38, %40 : vector<16x128xf32>
      %c0_27 = arith.constant 0 : index
      %c0_28 = arith.constant 0 : index
      %42 = vector.load %arg10[%c0_27, %c0_28] : memref<16x128xf32, #tpu.memory_space<vmem>>, vector<16x128xf32>
      tpu.vector_store %arg10[%c0_27, %c0_28], %41 {strides = array<i32>} : memref<16x128xf32, #tpu.memory_space<vmem>>, vector<16x128xf32>,
      %cst_29 = arith.constant 0.000000e+00 : f32
      %43 = vector.broadcast %cst_29 : f32 to vector<16x128xf32>
      %c0_30 = arith.constant 0 : index
      %c0_31 = arith.constant 0 : index
      %44 = vector.load %arg11[%c0_30, %c0_31] : memref<16x128xf32, #tpu.memory_space<vmem>>, vector<16x128xf32>
      tpu.vector_store %arg11[%c0_30, %c0_31], %43 {strides = array<i32>} : memref<16x128xf32, #tpu.memory_space<vmem>>, vector<16x128xf32>,
    } else {
    }
    %c0 = arith.constant 0 : index
    %c0_1 = arith.constant 0 : index
    %3 = vector.load %arg10[%c0, %c0_1] : memref<16x128xf32, #tpu.memory_space<vmem>>, vector<16x128xf32>
    %c0_2 = arith.constant 0 : index
    %c0_3 = arith.constant 0 : index
    %4 = vector.load %arg5[%c0_2, %c0_3] : memref<128x256xf32, #tpu.memory_space<vmem>>, vector<128x256xf32>
    %cst = arith.constant dense<0.000000e+00> : vector<16x256xf32>
    %5 = tpu.matmul %3, %4, %cst {dimension_numbers = #tpu.dot_dimension_numbers<[1], [0], [0], [1], [0, 0, 1, 1], [], []>} : vector<16x128xf32>, vector<128x256xf32>, vector<16x256xf32> -> vector<16x256xf32>
    %c0_4 = arith.constant 0 : index
    %c0_5 = arith.constant 0 : index
    %6 = vector.load %arg6[%c0_4, %c0_5] : memref<1x256xf32, #tpu.memory_space<vmem>>, vector<1x256xf32>
    %7 = vector.broadcast %6 : vector<1x256xf32> to vector<16x256xf32>
    %8 = arith.addf %5, %7 : vector<16x256xf32>
    %cst_6 = arith.constant 0.000000e+00 : f32
    %9 = vector.broadcast %cst_6 : f32 to vector<16x256xf32>
    %10 = arith.maximumf %8, %9 : vector<16x256xf32>
    %c0_7 = arith.constant 0 : index
    %c0_8 = arith.constant 0 : index
    %11 = vector.load %arg11[%c0_7, %c0_8] : memref<16x128xf32, #tpu.memory_space<vmem>>, vector<16x128xf32>
    %c0_9 = arith.constant 0 : index
    %c0_10 = arith.constant 0 : index
    %12 = vector.load %arg7[%c0_9, %c0_10] : memref<256x128xf32, #tpu.memory_space<vmem>>, vector<256x128xf32>
    %cst_11 = arith.constant dense<0.000000e+00> : vector<16x128xf32>
    %13 = tpu.matmul %10, %12, %cst_11 {dimension_numbers = #tpu.dot_dimension_numbers<[1], [0], [0], [1], [0, 0, 1, 1], [], []>} : vector<16x256xf32>, vector<256x128xf32>, vector<16x128xf32> -> vector<16x128xf32>
    %14 = arith.addf %11, %13 : vector<16x128xf32>
    %c0_12 = arith.constant 0 : index
    %c0_13 = arith.constant 0 : index
    %15 = vector.load %arg11[%c0_12, %c0_13] : memref<16x128xf32, #tpu.memory_space<vmem>>, vector<16x128xf32>
    tpu.vector_store %arg11[%c0_12, %c0_13], %14 {strides = array<i32>} : memref<16x128xf32, #tpu.memory_space<vmem>>, vector<16x128xf32>,
    %c0_i32_14 = arith.constant 0 : i32
    %16 = arith.cmpi eq, %arg1, %c0_i32_14 : i32
    %17 = arith.extui %16 : i1 to i32
    %c0_i32_15 = arith.constant 0 : i32
    %18 = arith.cmpi ne, %17, %c0_i32_15 : i32
    scf.if %18 {
      %c0_16 = arith.constant 0 : index
      %c0_17 = arith.constant 0 : index
      %19 = vector.load %arg11[%c0_16, %c0_17] : memref<16x128xf32, #tpu.memory_space<vmem>>, vector<16x128xf32>
      %c0_18 = arith.constant 0 : index
      %c0_19 = arith.constant 0 : index
      %20 = vector.load %arg8[%c0_18, %c0_19] : memref<1x128xf32, #tpu.memory_space<vmem>>, vector<1x128xf32>
      %21 = vector.broadcast %20 : vector<1x128xf32> to vector<16x128xf32>
      %22 = arith.addf %19, %21 : vector<16x128xf32>
      %c0_20 = arith.constant 0 : index
      %c0_21 = arith.constant 0 : index
      %23 = vector.load %arg2[%c0_20, %c0_21] : memref<16x128xf32, #tpu.memory_space<vmem>>, vector<16x128xf32>
      %24 = arith.addf %23, %22 : vector<16x128xf32>
      %c0_22 = arith.constant 0 : index
      %c0_23 = arith.constant 0 : index
      %25 = vector.load %arg9[%c0_22, %c0_23] : memref<16x128xf32, #tpu.memory_space<vmem>>, vector<16x128xf32>
      tpu.vector_store %arg9[%c0_22, %c0_23], %24 {strides = array<i32>} : memref<16x128xf32, #tpu.memory_space<vmem>>, vector<16x128xf32>,
    } else {
    }
    return
  }
  func.func @transform_0(%arg0: i32, %arg1: i32) -> (i32, i32) {
    %c0_i32 = arith.constant 0 : i32
    %c0_i32_0 = arith.constant 0 : i32
    return %arg0, %c0_i32 : i32, i32
  }
  func.func @transform_1(%arg0: i32, %arg1: i32) -> (i32, i32) {
    %c0_i32 = arith.constant 0 : i32
    %c0_i32_0 = arith.constant 0 : i32
    %c0_i32_1 = arith.constant 0 : i32
    return %c0_i32, %c0_i32_0 : i32, i32
  }
  func.func @transform_2(%arg0: i32, %arg1: i32) -> (i32, i32) {
    %c0_i32 = arith.constant 0 : i32
    %c0_i32_0 = arith.constant 0 : i32
    %c0_i32_1 = arith.constant 0 : i32
    return %c0_i32, %c0_i32_0 : i32, i32
  }
  func.func @transform_3(%arg0: i32, %arg1: i32) -> (i32, i32) {
    %c0_i32 = arith.constant 0 : i32
    %c0_i32_0 = arith.constant 0 : i32
    return %c0_i32, %arg1 : i32, i32
  }
  func.func @transform_4(%arg0: i32, %arg1: i32) -> (i32, i32) {
    %c0_i32 = arith.constant 0 : i32
    %c0_i32_0 = arith.constant 0 : i32
    return %c0_i32, %arg1 : i32, i32
  }
  func.func @transform_5(%arg0: i32, %arg1: i32) -> (i32, i32) {
    %c0_i32 = arith.constant 0 : i32
    %c0_i32_0 = arith.constant 0 : i32
    return %arg1, %c0_i32 : i32, i32
  }
  func.func @transform_6(%arg0: i32, %arg1: i32) -> (i32, i32) {
    %c0_i32 = arith.constant 0 : i32
    %c0_i32_0 = arith.constant 0 : i32
    %c0_i32_1 = arith.constant 0 : i32
    return %c0_i32, %c0_i32_0 : i32, i32
  }
  func.func @transform_7(%arg0: i32, %arg1: i32) -> (i32, i32) {
    %c0_i32 = arith.constant 0 : i32
    %c0_i32_0 = arith.constant 0 : i32
    return %arg0, %c0_i32 : i32, i32
  }
}

</mosaic_0001>

<llo_original>
// kernel: tpu_custom_call.1
$region0: #{tpu_custom_call.1}
  #allocation0 [shape = 'u32[]', space=smem, size = 0x4, offset = 0x4, fixed_abs, tag = 'smem constant byte address 0x4 - core index']
  #allocation1 [shape = 'u32[144,128]{1,0:T(1,128)}', space=vmem, size = 0x12000, scoped, tag = 'internal scratch']
  #allocation2 [shape = 'f32[16,128]{1,0:T(8,128)}', space=vmem, size = 0x2000, scoped, tag = 'scratch operand']
  #allocation3 [shape = 'f32[16,128]{1,0:T(8,128)}', space=vmem, size = 0x2000, scoped, tag = 'scratch operand']
  %s0 = inlined_call_operand.hbm [shape: f32[16,128], index: 0, kind: input, shape index: {}]
  %s1 = inlined_call_operand.vmem [shape: f32[1,128], index: 1, kind: input, shape index: {}]
  %s2 = inlined_call_operand.vmem [shape: f32[1,128], index: 2, kind: input, shape index: {}]
  %s3 = inlined_call_operand.hbm [shape: f32[128,256], index: 3, kind: input, shape index: {}]
  %s4 = inlined_call_operand.vmem [shape: f32[1,256], index: 4, kind: input, shape index: {}]
  %s5 = inlined_call_operand.hbm [shape: f32[256,128], index: 5, kind: input, shape index: {}]
  %s6 = inlined_call_operand.vmem [shape: f32[1,128], index: 6, kind: input, shape index: {}]
  %s7 = inlined_call_operand.hbm [shape: f32[16,128], index: 7, kind: output, shape index: {}]
  %s8 = sld [smem:[#allocation0]]
  $region58: #{tpu_custom_call.1} parent=0
    _
  %s10 = ssub.s32 1, %s8
  %s11 = scalar_select 0, %s10, %s8
  $region1: #{tpu_custom_call.1} parent=0
    #allocation4 [shape = 'u8[8192]{0}', space=vmem, size = 0x2000, scoped, tag = 'input window, operand 0, single buffered']
    #allocation5 [shape = 's32[1]{0}', space=sflag, size = 0x4, scoped, tag = 'scoped memory for tpu_custom_call.1']
    #allocation6 [shape = 's32[1]{0}', space=sflag, size = 0x4, scoped, tag = 'scoped memory for tpu_custom_call.1']
    #allocation7 [shape = 'u8[131072]{0}', space=vmem, size = 0x20000, scoped, tag = 'input window, operand 3, single buffered']
    #allocation8 [shape = 's32[1]{0}', space=sflag, size = 0x4, scoped, tag = 'scoped memory for tpu_custom_call.1']
    #allocation9 [shape = 'u8[131072]{0}', space=vmem, size = 0x20000, scoped, tag = 'input window, operand 5, single buffered']
    #allocation10 [shape = 'u8[8192]{0}', space=vmem, size = 0x2000, scoped, tag = 'output window, operand 0, single buffered']
    %12 = vsyncpa [#allocation5], 0
    %13 = vsyncpa [#allocation8], 0
    %14 = vsyncpa [#allocation6], 0
    // Predicated region
    $region2: #{tpu_custom_call.1} parent=1 // pred_check
      _
    $region3: #{tpu_custom_call.1} parent=1 // pred_check_branch
      %16 = sbr.rel (0) target = $region5
    $region4: #{tpu_custom_call.1} parent=1 // pred_region
      %s18 = ssub.s32 256, 256
      %19 = vsyncadd [#allocation5], %s18
      %s20 = sshll.u32 [#allocation4], 4
      %s21 = int_to_ptr.vmem [resolvable:$true] %s20
      %26 = dma.hbm_to_vmem [thread:$0]  %s0, 256, %s21, [#allocation5], 128, 128, 8
    $region5: #{tpu_custom_call.1} parent=1 // pred_fallthru
      _
    // Predicated region
    $region6: #{tpu_custom_call.1} parent=1 // pred_check
      _
    $region7: #{tpu_custom_call.1} parent=1 // pred_check_branch
      %28 = sbr.rel (0) target = $region9
    $region8: #{tpu_custom_call.1} parent=1 // pred_region
      _
    $region9: #{tpu_custom_call.1} parent=1 // pred_fallthru
      _
    // Predicated region
    $region10: #{tpu_custom_call.1} parent=1 // pred_check
      _
    $region11: #{tpu_custom_call.1} parent=1 // pred_check_branch
      %30 = sbr.rel (0) target = $region13
    $region12: #{tpu_custom_call.1} parent=1 // pred_region
      _
    $region13: #{tpu_custom_call.1} parent=1 // pred_fallthru
      _
    // Predicated region
    $region14: #{tpu_custom_call.1} parent=1 // pred_check
      _
    $region15: #{tpu_custom_call.1} parent=1 // pred_check_branch
      %32 = sbr.rel (0) target = $region17
    $region16: #{tpu_custom_call.1} parent=1 // pred_region
      %s34 = ssub.s32 4096, 4096
      %35 = vsyncadd [#allocation8], %s34
      %s36 = sshll.u32 [#allocation7], 4
      %s37 = int_to_ptr.vmem [resolvable:$true] %s36
      %42 = dma.hbm_to_vmem [thread:$0]  %s3, 4096, %s37, [#allocation8], 256, 256, 16
    $region17: #{tpu_custom_call.1} parent=1 // pred_fallthru
      _
    // Predicated region
    $region18: #{tpu_custom_call.1} parent=1 // pred_check
      _
    $region19: #{tpu_custom_call.1} parent=1 // pred_check_branch
      %44 = sbr.rel (0) target = $region21
    $region20: #{tpu_custom_call.1} parent=1 // pred_region
      _
    $region21: #{tpu_custom_call.1} parent=1 // pred_fallthru
      _
    // Predicated region
    $region22: #{tpu_custom_call.1} parent=1 // pred_check
      _
    $region23: #{tpu_custom_call.1} parent=1 // pred_check_branch
      %46 = sbr.rel (0) target = $region25
    $region24: #{tpu_custom_call.1} parent=1 // pred_region
      %s48 = ssub.s32 4096, 4096
      %49 = vsyncadd [#allocation8], %s48
      %s50 = sshll.u32 [#allocation9], 4
      %s51 = int_to_ptr.vmem [resolvable:$true] %s50
      %56 = dma.hbm_to_vmem [thread:$0]  %s5, 4096, %s51, [#allocation8], 128, 128, 8
    $region25: #{tpu_custom_call.1} parent=1 // pred_fallthru
      _
    // Predicated region
    $region26: #{tpu_custom_call.1} parent=1 // pred_check
      _
    $region27: #{tpu_custom_call.1} parent=1 // pred_check_branch
      %58 = sbr.rel (0) target = $region29
    $region28: #{tpu_custom_call.1} parent=1 // pred_region
      _
    $region29: #{tpu_custom_call.1} parent=1 // pred_fallthru
      _
    // Predicated region
    $region30: #{tpu_custom_call.1} parent=1 // pred_check
      _
    $region31: #{tpu_custom_call.1} parent=1 // pred_check_branch
      %60 = sbr.rel (0) target = $region33
    $region32: #{tpu_custom_call.1} parent=1 // pred_region
      %61 = dma.done [#allocation5], 256
    $region33: #{tpu_custom_call.1} parent=1 // pred_fallthru
      _
    // Predicated region
    $region34: #{tpu_custom_call.1} parent=1 // pred_check
      _
    $region35: #{tpu_custom_call.1} parent=1 // pred_check_branch
      %63 = sbr.rel (0) target = $region37
    $region36: #{tpu_custom_call.1} parent=1 // pred_region
      %64 = dma.done [#allocation8], 4096
    $region37: #{tpu_custom_call.1} parent=1 // pred_fallthru
      _
    // Predicated region
    $region38: #{tpu_custom_call.1} parent=1 // pred_check
      _
    $region39: #{tpu_custom_call.1} parent=1 // pred_check_branch
      %66 = sbr.rel (0) target = $region41
    $region40: #{tpu_custom_call.1} parent=1 // pred_region
      %67 = dma.done [#allocation8], 4096
    $region41: #{tpu_custom_call.1} parent=1 // pred_fallthru
      _
    %p68 = scmp.eq.s32.totalorder 0, 0
    // Predicated region
    $region42: #{tpu_custom_call.1} parent=1 // pred_check
      %p69 = pneg %p68
    $region43: #{tpu_custom_call.1} parent=1 // pred_check_branch
      %71 = sbr.rel (%p69) target = $region45
    $region44: #{tpu_custom_call.1} parent=1 // pred_region
      %v72 = vld [vmem:[#allocation4] sm:$0xff]
      %v73 = vld [vmem:[#allocation4 + $0x8] sm:$0xff]
      %74 = vadd.xlane.f32.xlu0 %v72
      %v75 = vpop.xlane.xlu0 %74
      %76 = vadd.xlane.f32.xlu0 %v73
      %v77 = vpop.xlane.xlu0 %76
      %v78 = vrcp.pop 128.0
      %v79 = vmul.f32 %v75, %v78
      %v80 = vmul.f32 %v77, %v78
      %v81 = vsub.f32 %v72, %v79
      %v82 = vsub.f32 %v73, %v80
      %v83 = vmul.f32 %v81, %v81
      %v84 = vmul.f32 %v82, %v82
      %85 = vadd.xlane.f32.xlu0 %v83
      %v86 = vpop.xlane.xlu0 %85
      %87 = vadd.xlane.f32.xlu0 %v84
      %v88 = vpop.xlane.xlu0 %87
      %v89 = vmul.f32 %v86, %v78
      %v90 = vmul.f32 %v88, %v78
      %v91 = vadd.f32 %v89, 1e-05
      %v92 = vadd.f32 %v90, 1e-05
      %v93 = vrsqrt.pop %v91
      %v94 = vrsqrt.pop %v92
      %v95 = vmul.f32 %v81, %v93
      %v96 = vmul.f32 %v82, %v94
      %v97 = vld [vmem:[%s1] sm:$0x1]
      %v99 = vlaneseq
      %v100 = vshrl.u32 %v99, 7
      %v101 = vsub.s32 0, %v100
      %v102 = vrot.slane %v97, %v101
      %v104 = vmul.f32 %v95, %v102
      %v105 = vmul.f32 %v96, %v102
      %v106 = vld [vmem:[%s2] sm:$0x1]
      %v108 = vlaneseq
      %v109 = vshrl.u32 %v108, 7
      %v110 = vsub.s32 0, %v109
      %v111 = vrot.slane %v106, %v110
      %v113 = vadd.f32 %v104, %v111
      %v114 = vadd.f32 %v105, %v111
      %115 = vst [vmem:[#allocation2] sm:$0xff] %v113
      %116 = vst [vmem:[#allocation2 + $0x8] sm:$0xff] %v114
      %117 = vst [vmem:[#allocation3] sm:$0xff] 0.0
      %118 = vst [vmem:[#allocation3 + $0x8] sm:$0xff] 0.0
    $region45: #{tpu_custom_call.1} parent=1 // pred_fallthru
      _
    %v119 = vld [vmem:[#allocation2] sm:$0xff]
    %v120 = vld [vmem:[#allocation2 + $0x8] sm:$0xff]
    %v121 = vld [vmem:[#allocation7] sm:$0xff]
    %v122 = vld [vmem:[#allocation7 + $0x8] sm:$0xff]
    %v123 = vld [vmem:[#allocation7 + $0x10] sm:$0xff]
    %v124 = vld [vmem:[#allocation7 + $0x18] sm:$0xff]
    %v125 = vld [vmem:[#allocation7 + $0x20] sm:$0xff]
    %v126 = vld [vmem:[#allocation7 + $0x28] sm:$0xff]
    %v127 = vld [vmem:[#allocation7 + $0x30] sm:$0xff]
    %v128 = vld [vmem:[#allocation7 + $0x38] sm:$0xff]
    %v129 = vld [vmem:[#allocation7 + $0x40] sm:$0xff]
    %v130 = vld [vmem:[#allocation7 + $0x48] sm:$0xff]
    %v131 = vld [vmem:[#allocation7 + $0x50] sm:$0xff]
    %v132 = vld [vmem:[#allocation7 + $0x58] sm:$0xff]
    %v133 = vld [vmem:[#allocation7 + $0x60] sm:$0xff]
    %v134 = vld [vmem:[#allocation7 + $0x68] sm:$0xff]
    %v135 = vld [vmem:[#allocation7 + $0x70] sm:$0xff]
    %v136 = vld [vmem:[#allocation7 + $0x78] sm:$0xff]
    %v137 = vld [vmem:[#allocation7 + $0x80] sm:$0xff]
    %v138 = vld [vmem:[#allocation7 + $0x88] sm:$0xff]
    %v139 = vld [vmem:[#allocation7 + $0x90] sm:$0xff]
    %v140 = vld [vmem:[#allocation7 + $0x98] sm:$0xff]
    %v141 = vld [vmem:[#allocation7 + $0xa0] sm:$0xff]
    %v142 = vld [vmem:[#allocation7 + $0xa8] sm:$0xff]
    %v143 = vld [vmem:[#allocation7 + $0xb0] sm:$0xff]
    %v144 = vld [vmem:[#allocation7 + $0xb8] sm:$0xff]
    %v145 = vld [vmem:[#allocation7 + $0xc0] sm:$0xff]
    %v146 = vld [vmem:[#allocation7 + $0xc8] sm:$0xff]
    %v147 = vld [vmem:[#allocation7 + $0xd0] sm:$0xff]
    %v148 = vld [vmem:[#allocation7 + $0xd8] sm:$0xff]
    %v149 = vld [vmem:[#allocation7 + $0xe0] sm:$0xff]
    %v150 = vld [vmem:[#allocation7 + $0xe8] sm:$0xff]
    %v151 = vld [vmem:[#allocation7 + $0xf0] sm:$0xff]
    %v152 = vld [vmem:[#allocation7 + $0xf8] sm:$0xff]
    %v153 = vld [vmem:[%s4] sm:$0x3]
    %v155 = vlaneseq
    %v156 = vshrl.u32 %v155, 7
    %v157 = vsub.s32 0, %v156
    %v158 = vrot.slane %v153, %v157
    %v159 = vlaneseq
    %v160 = vshrl.u32 %v159, 7
    %v161 = vsub.s32 1, %v160
    %v162 = vrot.slane %v153, %v161
    %165 = vmatprep.subr.mxu0 %v122
    %166 = vmatpush1.msra.mxu0 %v121
    %167 = vmatprep.subr.mxu0 %v124
    %168 = vmatpush1.msra.mxu0 %v123
    %169 = vmatprep.subr.mxu0 %v126
    %170 = vmatpush1.msra.mxu0 %v125
    %171 = vmatprep.subr.mxu0 %v128
    %172 = vmatpush1.msra.mxu0 %v127
    %173 = vmatprep.subr.mxu0 %v130
    %174 = vmatpush1.msra.mxu0 %v129
    %175 = vmatprep.subr.mxu0 %v132
    %176 = vmatpush1.msra.mxu0 %v131
    %177 = vmatprep.subr.mxu0 %v134
    %178 = vmatpush1.msra.mxu0 %v133
    %179 = vmatprep.subr.mxu0 %v136
    %180 = vmatpush1.msra.mxu0 %v135
    %181 = vmatprep.subr.mxu0 %v138
    %182 = vmatpush1.msra.mxu0 %v137
    %183 = vmatprep.subr.mxu0 %v140
    %184 = vmatpush1.msra.mxu0 %v139
    %185 = vmatprep.subr.mxu0 %v142
    %186 = vmatpush1.msra.mxu0 %v141
    %187 = vmatprep.subr.mxu0 %v144
    %188 = vmatpush1.msra.mxu0 %v143
    %189 = vmatprep.subr.mxu0 %v146
    %190 = vmatpush1.msra.mxu0 %v145
    %191 = vmatprep.subr.mxu0 %v148
    %192 = vmatpush1.msra.mxu0 %v147
    %193 = vmatprep.subr.mxu0 %v150
    %194 = vmatpush1.msra.mxu0 %v149
    %195 = vmatprep.subr.mxu0 %v152
    %196 = vmatpush1.msra.mxu0 %v151
    %197 = vmatprep.subr.mxu0 0.0
    %198 = vmatpush1.msra.mxu0 0.0
    %199 = vmatprep.subr.mxu0 0.0
    %200 = vmatpush1.msra.mxu0 0.0
    %201 = vmatprep.subr.mxu0 0.0
    %202 = vmatpush1.msra.mxu0 0.0
    %203 = vmatprep.subr.mxu0 0.0
    %204 = vmatpush1.msra.mxu0 0.0
    %205 = vmatprep.subr.mxu0 0.0
    %206 = vmatpush1.msra.mxu0 0.0
    %207 = vmatprep.subr.mxu0 0.0
    %208 = vmatpush1.msra.mxu0 0.0
    %209 = vmatprep.subr.mxu0 0.0
    %210 = vmatpush1.msra.mxu0 0.0
    %211 = vmatprep.subr.mxu0 0.0
    %212 = vmatpush1.msra.mxu0 0.0
    %213 = vmatprep.subr.mxu0 0.0
    %214 = vmatpush1.msra.mxu0 0.0
    %215 = vmatprep.subr.mxu0 0.0
    %216 = vmatpush1.msra.mxu0 0.0
    %217 = vmatprep.subr.mxu0 0.0
    %218 = vmatpush1.msra.mxu0 0.0
    %219 = vmatprep.subr.mxu0 0.0
    %220 = vmatpush1.msra.mxu0 0.0
    %221 = vmatprep.subr.mxu0 0.0
    %222 = vmatpush1.msra.mxu0 0.0
    %223 = vmatprep.subr.mxu0 0.0
    %224 = vmatpush1.msra.mxu0 0.0
    %225 = vmatprep.subr.mxu0 0.0
    %226 = vmatpush1.msra.mxu0 0.0
    %227 = vmatprep.subr.mxu0 0.0
    %228 = vmatpush1.msra.mxu0 0.0
    %229 = vmatprep.mubr.f32.mxu0 0.0
    %230 = vmatmul.mubr.f32.gmra.mrb[0].mxu0 %v119
    %v231 = vpop.f32.mrb[0].mxu0
    %v232 = vadd.f32 %v158, %v231
    %v233 = vpop.f32.mrb[0].mxu0
    %v234 = vadd.f32 %v162, %v233
    %235 = vmatprep.mubr.f32.mxu0 0.0
    %236 = vmatmul.mubr.f32.gmra.mrb[0].mxu0 %v120
    %v237 = vpop.f32.mrb[0].mxu0
    %v238 = vadd.f32 %v158, %v237
    %v239 = vpop.f32.mrb[0].mxu0
    %v240 = vadd.f32 %v162, %v239
    %241 = vdwg.mxu0
    %v242 = vmax.f32 %v232, 0.0
    %v243 = vmax.f32 %v234, 0.0
    %v244 = vmax.f32 %v238, 0.0
    %v245 = vmax.f32 %v240, 0.0
    %v246 = vld [vmem:[#allocation3] sm:$0xff]
    %v247 = vld [vmem:[#allocation3 + $0x8] sm:$0xff]
    %v248 = vld [vmem:[#allocation9] sm:$0xff]
    %v249 = vld [vmem:[#allocation9 + $0x8] sm:$0xff]
    %v250 = vld [vmem:[#allocation9 + $0x10] sm:$0xff]
    %v251 = vld [vmem:[#allocation9 + $0x18] sm:$0xff]
    %v252 = vld [vmem:[#allocation9 + $0x20] sm:$0xff]
    %v253 = vld [vmem:[#allocation9 + $0x28] sm:$0xff]
    %v254 = vld [vmem:[#allocation9 + $0x30] sm:$0xff]
    %v255 = vld [vmem:[#allocation9 + $0x38] sm:$0xff]
    %v256 = vld [vmem:[#allocation9 + $0x40] sm:$0xff]
    %v257 = vld [vmem:[#allocation9 + $0x48] sm:$0xff]
    %v258 = vld [vmem:[#allocation9 + $0x50] sm:$0xff]
    %v259 = vld [vmem:[#allocation9 + $0x58] sm:$0xff]
    %v260 = vld [vmem:[#allocation9 + $0x60] sm:$0xff]
    %v261 = vld [vmem:[#allocation9 + $0x68] sm:$0xff]
    %v262 = vld [vmem:[#allocation9 + $0x70] sm:$0xff]
    %v263 = vld [vmem:[#allocation9 + $0x78] sm:$0xff]
    %v264 = vld [vmem:[#allocation9 + $0x80] sm:$0xff]
    %v265 = vld [vmem:[#allocation9 + $0x88] sm:$0xff]
    %v266 = vld [vmem:[#allocation9 + $0x90] sm:$0xff]
    %v267 = vld [vmem:[#allocation9 + $0x98] sm:$0xff]
    %v268 = vld [vmem:[#allocation9 + $0xa0] sm:$0xff]
    %v269 = vld [vmem:[#allocation9 + $0xa8] sm:$0xff]
    %v270 = vld [vmem:[#allocation9 + $0xb0] sm:$0xff]
    %v271 = vld [vmem:[#allocation9 + $0xb8] sm:$0xff]
    %v272 = vld [vmem:[#allocation9 + $0xc0] sm:$0xff]
    %v273 = vld [vmem:[#allocation9 + $0xc8] sm:$0xff]
    %v274 = vld [vmem:[#allocation9 + $0xd0] sm:$0xff]
    %v275 = vld [vmem:[#allocation9 + $0xd8] sm:$0xff]
    %v276 = vld [vmem:[#allocation9 + $0xe0] sm:$0xff]
    %v277 = vld [vmem:[#allocation9 + $0xe8] sm:$0xff]
    %v278 = vld [vmem:[#allocation9 + $0xf0] sm:$0xff]
    %v279 = vld [vmem:[#allocation9 + $0xf8] sm:$0xff]
    %280 = vmatprep.subr.mxu0 0.0
    %281 = vmatpush1.msra.mxu0 %v248
    %282 = vmatprep.subr.mxu0 0.0
    %283 = vmatpush1.msra.mxu0 %v249
    %284 = vmatprep.subr.mxu0 0.0
    %285 = vmatpush1.msra.mxu0 %v250
    %286 = vmatprep.subr.mxu0 0.0
    %287 = vmatpush1.msra.mxu0 %v251
    %288 = vmatprep.subr.mxu0 0.0
    %289 = vmatpush1.msra.mxu0 %v252
    %290 = vmatprep.subr.mxu0 0.0
    %291 = vmatpush1.msra.mxu0 %v253
    %292 = vmatprep.subr.mxu0 0.0
    %293 = vmatpush1.msra.mxu0 %v254
    %294 = vmatprep.subr.mxu0 0.0
    %295 = vmatpush1.msra.mxu0 %v255
    %296 = vmatprep.subr.mxu0 0.0
    %297 = vmatpush1.msra.mxu0 %v256
    %298 = vmatprep.subr.mxu0 0.0
    %299 = vmatpush1.msra.mxu0 %v257
    %300 = vmatprep.subr.mxu0 0.0
    %301 = vmatpush1.msra.mxu0 %v258
    %302 = vmatprep.subr.mxu0 0.0
    %303 = vmatpush1.msra.mxu0 %v259
    %304 = vmatprep.subr.mxu0 0.0
    %305 = vmatpush1.msra.mxu0 %v260
    %306 = vmatprep.subr.mxu0 0.0
    %307 = vmatpush1.msra.mxu0 %v261
    %308 = vmatprep.subr.mxu0 0.0
    %309 = vmatpush1.msra.mxu0 %v262
    %310 = vmatprep.subr.mxu0 0.0
    %311 = vmatpush1.msra.mxu0 %v263
    %312 = vmatprep.subr.mxu0 0.0
    %313 = vmatpush1.msra.mxu0 %v264
    %314 = vmatprep.subr.mxu0 0.0
    %315 = vmatpush1.msra.mxu0 %v265
    %316 = vmatprep.subr.mxu0 0.0
    %317 = vmatpush1.msra.mxu0 %v266
    %318 = vmatprep.subr.mxu0 0.0
    %319 = vmatpush1.msra.mxu0 %v267
    %320 = vmatprep.subr.mxu0 0.0
    %321 = vmatpush1.msra.mxu0 %v268
    %322 = vmatprep.subr.mxu0 0.0
    %323 = vmatpush1.msra.mxu0 %v269
    %324 = vmatprep.subr.mxu0 0.0
    %325 = vmatpush1.msra.mxu0 %v270
    %326 = vmatprep.subr.mxu0 0.0
    %327 = vmatpush1.msra.mxu0 %v271
    %328 = vmatprep.subr.mxu0 0.0
    %329 = vmatpush1.msra.mxu0 %v272
    %330 = vmatprep.subr.mxu0 0.0
    %331 = vmatpush1.msra.mxu0 %v273
    %332 = vmatprep.subr.mxu0 0.0
    %333 = vmatpush1.msra.mxu0 %v274
    %334 = vmatprep.subr.mxu0 0.0
    %335 = vmatpush1.msra.mxu0 %v275
    %336 = vmatprep.subr.mxu0 0.0
    %337 = vmatpush1.msra.mxu0 %v276
    %338 = vmatprep.subr.mxu0 0.0
    %339 = vmatpush1.msra.mxu0 %v277
    %340 = vmatprep.subr.mxu0 0.0
    %341 = vmatpush1.msra.mxu0 %v278
    %342 = vmatprep.subr.mxu0 0.0
    %343 = vmatpush1.msra.mxu0 %v279
    %344 = vmatprep.mubr.f32.mxu0 %v243
    %345 = vmatmul.mubr.f32.gmra.mrb[0].mxu0 %v242
    %v346 = vpop.f32.mrb[0].mxu0
    %v347 = vadd.f32 0.0, %v346
    %v348 = vpop.f32.mrb[0].mxu0
    %349 = vmatprep.mubr.f32.mxu0 %v245
    %350 = vmatmul.mubr.f32.gmra.mrb[0].mxu0 %v244
    %v351 = vpop.f32.mrb[0].mxu0
    %v352 = vadd.f32 0.0, %v351
    %v353 = vpop.f32.mrb[0].mxu0
    %354 = vdwg.mxu0
    %v355 = vadd.f32 %v246, %v347
    %v356 = vadd.f32 %v247, %v352
    %357 = vst [vmem:[#allocation3] sm:$0xff] %v355
    %358 = vst [vmem:[#allocation3 + $0x8] sm:$0xff] %v356
    // Predicated region
    $region46: #{tpu_custom_call.1} parent=1 // pred_check
      %p359 = pneg %p68
    $region47: #{tpu_custom_call.1} parent=1 // pred_check_branch
      %361 = sbr.rel (%p359) target = $region49
    $region48: #{tpu_custom_call.1} parent=1 // pred_region
      %v362 = vld [vmem:[#allocation3] sm:$0xff]
      %v363 = vld [vmem:[#allocation3 + $0x8] sm:$0xff]
      %v364 = vld [vmem:[%s6] sm:$0x1]
      %v366 = vlaneseq
      %v367 = vshrl.u32 %v366, 7
      %v368 = vsub.s32 0, %v367
      %v369 = vrot.slane %v364, %v368
      %v371 = vadd.f32 %v362, %v369
      %v372 = vadd.f32 %v363, %v369
      %v373 = vld [vmem:[#allocation4] sm:$0xff]
      %v374 = vld [vmem:[#allocation4 + $0x8] sm:$0xff]
      %v375 = vadd.f32 %v373, %v371
      %v376 = vadd.f32 %v374, %v372
      %377 = vst [vmem:[#allocation10] sm:$0xff] %v375
      %378 = vst [vmem:[#allocation10 + $0x8] sm:$0xff] %v376
    $region49: #{tpu_custom_call.1} parent=1 // pred_fallthru
      _
    // Predicated region
    $region50: #{tpu_custom_call.1} parent=1 // pred_check
      _
    $region51: #{tpu_custom_call.1} parent=1 // pred_check_branch
      %380 = sbr.rel (0) target = $region53
    $region52: #{tpu_custom_call.1} parent=1 // pred_region
      %s382 = ssub.s32 256, 256
      %383 = vsyncadd [#allocation6], %s382
      %s384 = sshll.u32 [#allocation10], 4
      %s385 = int_to_ptr.vmem [resolvable:$true] %s384
      %390 = dma.vmem_to_hbm [thread:$0]  %s385, 256, %s7, [#allocation6], 128, 128, 8
    $region53: #{tpu_custom_call.1} parent=1 // pred_fallthru
      _
    // Predicated region
    $region54: #{tpu_custom_call.1} parent=1 // pred_check
      _
    $region55: #{tpu_custom_call.1} parent=1 // pred_check_branch
      %392 = sbr.rel (0) target = $region57
    $region56: #{tpu_custom_call.1} parent=1 // pred_region
      %393 = dma.done [#allocation6], 256
    $region57: #{tpu_custom_call.1} parent=1 // pred_fallthru
      _
    %394 = vsyncpa [#allocation5], 1
    %395 = vsyncpa [#allocation8], 1
    %396 = vsyncpa [#allocation6], 1

</llo_original>
